<compile_context>
chip_gen: v7x
topology: tpu7x:2x2x1
jax: 0.10.0
libtpu: 0.0.40
codegen_flags: <defaults>
</compile_context>

<pallas_src>
import functools

import jax
import jax.numpy as jnp
from jax.experimental import pallas as pl
from jax.experimental.pallas import tpu as pltpu

LANE = 128      # TPU lane width
SUBLANE = 16    # bf16 packs 16 rows per sublane vreg -> batch tiles are multiples of 16


def _round_up(n: int, m: int) -> int:
    return ((n + m - 1) // m) * m


def _pad_to(a, shape):
    pads = [(0, t - s) for s, t in zip(a.shape, shape)]
    if all(p == (0, 0) for p in pads):
        return a
    return jnp.pad(a, pads)


def _mlp_kernel(x_ref, w1_ref, b1_ref, w2_ref, b2_ref, w3_ref, b3_ref, o_ref):
    # Fused Linear->ReLU->Linear->ReLU->Linear on one batch tile, all in VMEM.
    # bf16 operands on the MXU with f32 accumulation; bias add / ReLU in f32.
    x = x_ref[...]                                                 # bf16 (bb, in)
    h1 = jnp.dot(x, w1_ref[...], preferred_element_type=jnp.float32)
    h1 = jnp.maximum(h1 + b1_ref[...], 0.0)                        # f32 (bb, 128)
    h2 = jnp.dot(h1.astype(jnp.bfloat16), w2_ref[...],
                 preferred_element_type=jnp.float32)
    h2 = jnp.maximum(h2 + b2_ref[...], 0.0)                        # f32 (bb, 128)
    # Final layer has a single output feature: VPU multiply + XLU lane reduction
    # instead of a 1/128-useful MXU matmul; result is (bb, 1) directly so the
    # output store / HBM writeback is only 4 bytes per row.
    y = jnp.sum(h2 * w3_ref[...], axis=-1, keepdims=True) + b3_ref[...]
    o_ref[...] = y.astype(o_ref.dtype)


@functools.partial(jax.jit, static_argnames=("block_b",))
def simple_nn_forward_pallas(x, w1, b1, w2, b2, w3, b3, *, block_b=4096):
    """Pallas forward pass equivalent to SimpleNN(input_dim). Weights are (in, out)."""
    batch, input_dim = x.shape
    out_dim = w3.shape[1]
    assert out_dim == 1, "SimpleNN's final Linear has a single output feature"

    # Lane-pad the hidden feature dims to multiples of 128 (zero padding is inert
    # through ReLU: zero weight columns + zero bias -> zero activations).
    h1p = _round_up(w1.shape[1], LANE)   # 32 -> 128
    h2p = _round_up(w2.shape[1], LANE)   # 16 -> 128

    # Weights in bf16 (halve HBM read + native MXU); biases stay f32.
    w1p = _pad_to(w1, (input_dim, h1p)).astype(jnp.bfloat16)
    b1p = _pad_to(b1, (1, h1p)).astype(jnp.float32)
    w2p = _pad_to(w2, (h1p, h2p)).astype(jnp.bfloat16)
    b2p = _pad_to(b2, (1, h2p)).astype(jnp.float32)
    w3row = _pad_to(w3.T, (1, h2p)).astype(jnp.float32)   # (1, 128) row for the VPU layer
    b3p = b3.reshape(1, 1).astype(jnp.float32)

    # Batch tiling: tiles are multiples of 16 (bf16 sublane packing); aim for >= 2
    # grid steps so v7x's two TensorCores both get work and the auto-pipeline can
    # overlap the x-load / out-store DMAs with compute.
    padded_b16 = _round_up(batch, SUBLANE)
    bb = min(block_b, _round_up(pl.cdiv(padded_b16, 2), SUBLANE))
    bb = max(bb, SUBLANE)
    padded_batch = _round_up(batch, bb)
    grid = (padded_batch // bb,)

    xp = _pad_to(x, (padded_batch, input_dim)).astype(jnp.bfloat16)

    out_padded = pl.pallas_call(
        _mlp_kernel,
        out_shape=jax.ShapeDtypeStruct((padded_batch, 1), jnp.float32),
        grid=grid,
        in_specs=[
            # streamed per batch tile
            pl.BlockSpec((bb, input_dim), lambda i: (i, 0)),
            # weights / biases: constant index_map -> resident across grid steps
            pl.BlockSpec((input_dim, h1p), lambda i: (0, 0)),
            pl.BlockSpec((1, h1p), lambda i: (0, 0)),
            pl.BlockSpec((h1p, h2p), lambda i: (0, 0)),
            pl.BlockSpec((1, h2p), lambda i: (0, 0)),
            pl.BlockSpec((1, h2p), lambda i: (0, 0)),
            pl.BlockSpec((1, 1), lambda i: (0, 0)),
        ],
        # Un-padded (bb, 1) output block: contiguous bb*4-byte writeback per step.
        out_specs=pl.BlockSpec((bb, 1), lambda i: (i, 0)),
        compiler_params=pltpu.CompilerParams(
            dimension_semantics=("parallel",),  # 2-TC sharding on v7x, no-op elsewhere
        ),
    )(xp, w1p, b1p, w2p, b2p, w3row, b3p)

    # Slice off padded batch rows; logical shape is (batch, 1).
    return out_padded[:batch, :]


@jax.jit
def _reference(x, w1, b1, w2, b2, w3, b3):
    h = jnp.maximum(x @ w1 + b1, 0.0)
    h = jnp.maximum(h @ w2 + b2, 0.0)
    return h @ w3 + b3


def simple_nn_forward(x, w1, b1, w2, b2, w3, b3, *, block_b=4096, min_pallas_batch=512):
    """Dispatch: tiny batches fuse better in plain XLA than a pallas_call launch."""
    if x.shape[0] < min_pallas_batch:
        return _reference(x, w1, b1, w2, b2, w3, b3)
    return simple_nn_forward_pallas(x, w1, b1, w2, b2, w3, b3, block_b=block_b)


def init_linear_params(key, in_features, out_features):
    # Mimic PyTorch nn.Linear default init: U(-1/sqrt(fan_in), 1/sqrt(fan_in)).
    kw, kb = jax.random.split(key)
    bound = 1.0 / jnp.sqrt(jnp.float32(in_features))
    # Stored as (in, out) so forward is x @ W + b.
    w = jax.random.uniform(kw, (in_features, out_features), jnp.float32, -bound, bound)
    b = jax.random.uniform(kb, (1, out_features), jnp.float32, -bound, bound)
    return w, b


if __name__ == "__main__":
    key = jax.random.PRNGKey(0)
    k_x, k_x2, k_l1, k_l2, k_l3 = jax.random.split(key, 5)

    input_dim = 16
    w1, b1 = init_linear_params(k_l1, input_dim, 32)
    w2, b2 = init_linear_params(k_l2, 32, 16)
    w3, b3 = init_linear_params(k_l3, 16, 1)

    # Small-shape case routed through the Pallas kernel (single grid step).
    x = jax.random.normal(k_x, (8, input_dim), jnp.float32)
    out = simple_nn_forward_pallas(x, w1, b1, w2, b2, w3, b3)
    jax.block_until_ready(out)
    ref = _reference(x, w1, b1, w2, b2, w3, b3)
    assert out.shape == (8, 1)
    # bf16 inputs/weights (f32 accumulate) -> ~1e-2-level error vs the f32 reference.
    assert jnp.allclose(out, ref, atol=5e-2, rtol=5e-2)

    # Non-multiple batch -> batch padding, multi-step grid, resident weights.
    x2 = jax.random.normal(k_x2, (300, input_dim), jnp.float32)
    out2 = simple_nn_forward_pallas(x2, w1, b1, w2, b2, w3, b3, block_b=128)
    jax.block_until_ready(out2)
    ref2 = _reference(x2, w1, b1, w2, b2, w3, b3)
    assert out2.shape == (300, 1)
    assert jnp.allclose(out2, ref2, atol=5e-2, rtol=5e-2)

    # Default dispatch: tiny batches skip the Pallas launch entirely (exact f32 path).
    out3 = simple_nn_forward(x, w1, b1, w2, b2, w3, b3)
    jax.block_until_ready(out3)
    assert jnp.allclose(out3, ref, atol=1e-5, rtol=1e-5)

    print("KERNEL_OK")
</pallas_src>

<mosaic_0001>
module attributes {stable_mosaic.version = 11 : i64} {
  func.func @_mlp_kernel(%arg0: i32, %arg1: memref<16x16xbf16, #tpu.memory_space<vmem>>, %arg2: memref<16x128xbf16, #tpu.memory_space<vmem>>, %arg3: memref<1x128xf32, #tpu.memory_space<vmem>>, %arg4: memref<128x128xbf16, #tpu.memory_space<vmem>>, %arg5: memref<1x128xf32, #tpu.memory_space<vmem>>, %arg6: memref<1x128xf32, #tpu.memory_space<vmem>>, %arg7: memref<1x1xf32, #tpu.memory_space<vmem>>, %arg8: memref<16x1xf32, #tpu.memory_space<vmem>>) attributes {dimension_semantics = [#tpu.dimension_semantics<parallel>], iteration_bounds = array<i64: 1>, scalar_prefetch = 0 : i64, scratch_operands = 0 : i64, tpu.core_type = #tpu.core_type<tc>, window_params = [{transform_indices = @transform_0, window_bounds = array<i64: 16, 16>}, {pipeline_mode = #tpu.pipeline_mode<synchronous>, transform_indices = @transform_1, window_bounds = array<i64: 16, 128>}, {pipeline_mode = #tpu.pipeline_mode<synchronous>, transform_indices = @transform_2, window_bounds = array<i64: 1, 128>}, {pipeline_mode = #tpu.pipeline_mode<synchronous>, transform_indices = @transform_3, window_bounds = array<i64: 128, 128>}, {pipeline_mode = #tpu.pipeline_mode<synchronous>, transform_indices = @transform_4, window_bounds = array<i64: 1, 128>}, {pipeline_mode = #tpu.pipeline_mode<synchronous>, transform_indices = @transform_5, window_bounds = array<i64: 1, 128>}, {pipeline_mode = #tpu.pipeline_mode<synchronous>, transform_indices = @transform_6, window_bounds = array<i64: 1, 1>}, {transform_indices = @transform_7, window_bounds = array<i64: 16, 1>}]} {
    %c0 = arith.constant 0 : index
    %c0_0 = arith.constant 0 : index
    %0 = vector.load %arg1[%c0, %c0_0] : memref<16x16xbf16, #tpu.memory_space<vmem>>, vector<16x16xbf16>
    %c0_1 = arith.constant 0 : index
    %c0_2 = arith.constant 0 : index
    %1 = vector.load %arg2[%c0_1, %c0_2] : memref<16x128xbf16, #tpu.memory_space<vmem>>, vector<16x128xbf16>
    %cst = arith.constant dense<0.000000e+00> : vector<16x128xf32>
    %2 = tpu.matmul %0, %1, %cst {dimension_numbers = #tpu.dot_dimension_numbers<[1], [0], [0], [1], [0, 0, 1, 1], [], []>} : vector<16x16xbf16>, vector<16x128xbf16>, vector<16x128xf32> -> vector<16x128xf32>
    %c0_3 = arith.constant 0 : index
    %c0_4 = arith.constant 0 : index
    %3 = vector.load %arg3[%c0_3, %c0_4] : memref<1x128xf32, #tpu.memory_space<vmem>>, vector<1x128xf32>
    %4 = vector.broadcast %3 : vector<1x128xf32> to vector<16x128xf32>
    %5 = arith.addf %2, %4 : vector<16x128xf32>
    %cst_5 = arith.constant 0.000000e+00 : f32
    %6 = vector.broadcast %cst_5 : f32 to vector<16x128xf32>
    %7 = arith.maximumf %5, %6 : vector<16x128xf32>
    %8 = arith.truncf %7 : vector<16x128xf32> to vector<16x128xbf16>
    %c0_6 = arith.constant 0 : index
    %c0_7 = arith.constant 0 : index
    %9 = vector.load %arg4[%c0_6, %c0_7] : memref<128x128xbf16, #tpu.memory_space<vmem>>, vector<128x128xbf16>
    %cst_8 = arith.constant dense<0.000000e+00> : vector<16x128xf32>
    %10 = tpu.matmul %8, %9, %cst_8 {dimension_numbers = #tpu.dot_dimension_numbers<[1], [0], [0], [1], [0, 0, 1, 1], [], []>} : vector<16x128xbf16>, vector<128x128xbf16>, vector<16x128xf32> -> vector<16x128xf32>
    %c0_9 = arith.constant 0 : index
    %c0_10 = arith.constant 0 : index
    %11 = vector.load %arg5[%c0_9, %c0_10] : memref<1x128xf32, #tpu.memory_space<vmem>>, vector<1x128xf32>
    %12 = vector.broadcast %11 : vector<1x128xf32> to vector<16x128xf32>
    %13 = arith.addf %10, %12 : vector<16x128xf32>
    %cst_11 = arith.constant 0.000000e+00 : f32
    %14 = vector.broadcast %cst_11 : f32 to vector<16x128xf32>
    %15 = arith.maximumf %13, %14 : vector<16x128xf32>
    %c0_12 = arith.constant 0 : index
    %c0_13 = arith.constant 0 : index
    %16 = vector.load %arg6[%c0_12, %c0_13] : memref<1x128xf32, #tpu.memory_space<vmem>>, vector<1x128xf32>
    %17 = vector.broadcast %16 : vector<1x128xf32> to vector<16x128xf32>
    %18 = arith.mulf %15, %17 : vector<16x128xf32>
    %cst_14 = arith.constant dense<0.000000e+00> : vector<16xf32>
    %19 = vector.multi_reduction <add>, %18, %cst_14 [1] : vector<16x128xf32> to vector<16xf32>
    %20 = vector.shape_cast %19 : vector<16xf32> to vector<16x1xf32>
    %c0_15 = arith.constant 0 : index
    %c0_16 = arith.constant 0 : index
    %21 = vector.load %arg7[%c0_15, %c0_16] : memref<1x1xf32, #tpu.memory_space<vmem>>, vector<1x1xf32>
    %22 = vector.broadcast %21 : vector<1x1xf32> to vector<16x1xf32>
    %23 = arith.addf %20, %22 : vector<16x1xf32>
    %c0_17 = arith.constant 0 : index
    %c0_18 = arith.constant 0 : index
    %24 = vector.load %arg8[%c0_17, %c0_18] : memref<16x1xf32, #tpu.memory_space<vmem>>, vector<16x1xf32>
    tpu.vector_store %arg8[%c0_17, %c0_18], %23 {strides = array<i32>} : memref<16x1xf32, #tpu.memory_space<vmem>>, vector<16x1xf32>,
    return
  }
  func.func @transform_0(%arg0: i32) -> (i32, i32) {
    %c0_i32 = arith.constant 0 : i32
    %c0_i32_0 = arith.constant 0 : i32
    return %arg0, %c0_i32 : i32, i32
  }
  func.func @transform_1(%arg0: i32) -> (i32, i32) {
    %c0_i32 = arith.constant 0 : i32
    %c0_i32_0 = arith.constant 0 : i32
    %c0_i32_1 = arith.constant 0 : i32
    return %c0_i32, %c0_i32_0 : i32, i32
  }
  func.func @transform_2(%arg0: i32) -> (i32, i32) {
    %c0_i32 = arith.constant 0 : i32
    %c0_i32_0 = arith.constant 0 : i32
    %c0_i32_1 = arith.constant 0 : i32
    return %c0_i32, %c0_i32_0 : i32, i32
  }
  func.func @transform_3(%arg0: i32) -> (i32, i32) {
    %c0_i32 = arith.constant 0 : i32
    %c0_i32_0 = arith.constant 0 : i32
    %c0_i32_1 = arith.constant 0 : i32
    return %c0_i32, %c0_i32_0 : i32, i32
  }
  func.func @transform_4(%arg0: i32) -> (i32, i32) {
    %c0_i32 = arith.constant 0 : i32
    %c0_i32_0 = arith.constant 0 : i32
    %c0_i32_1 = arith.constant 0 : i32
    return %c0_i32, %c0_i32_0 : i32, i32
  }
  func.func @transform_5(%arg0: i32) -> (i32, i32) {
    %c0_i32 = arith.constant 0 : i32
    %c0_i32_0 = arith.constant 0 : i32
    %c0_i32_1 = arith.constant 0 : i32
    return %c0_i32, %c0_i32_0 : i32, i32
  }
  func.func @transform_6(%arg0: i32) -> (i32, i32) {
    %c0_i32 = arith.constant 0 : i32
    %c0_i32_0 = arith.constant 0 : i32
    %c0_i32_1 = arith.constant 0 : i32
    return %c0_i32, %c0_i32_0 : i32, i32
  }
  func.func @transform_7(%arg0: i32) -> (i32, i32) {
    %c0_i32 = arith.constant 0 : i32
    %c0_i32_0 = arith.constant 0 : i32
    return %arg0, %c0_i32 : i32, i32
  }
}

</mosaic_0001>

<llo_original>
// kernel: simple_nn_forward_pallas.1
$region0: #{simple_nn_forward_pallas.1}
  #allocation0 [shape = 'u32[]', space=smem, size = 0x4, offset = 0x4, fixed_abs, tag = 'smem constant byte address 0x4 - core index']
  #allocation1 [shape = 'u32[144,128]{1,0:T(1,128)}', space=vmem, size = 0x12000, scoped, tag = 'internal scratch']
  #allocation2 [shape = 'f32[1,1]{1,0:T(1,128)S(1)}', space=vmem, size = 0x200, scoped, tag = 'scoped memory for simple_nn_forward_pallas.1']
  %s0 = inlined_call_operand.vmem [shape: bf16[16,16], index: 0, kind: input, shape index: {}]
  %s1 = inlined_call_operand.vmem [shape: bf16[16,128], index: 1, kind: input, shape index: {}]
  %s2 = inlined_call_operand.vmem [shape: f32[1,128], index: 2, kind: input, shape index: {}]
  %s3 = inlined_call_operand.vmem [shape: bf16[128,128], index: 3, kind: input, shape index: {}]
  %s4 = inlined_call_operand.vmem [shape: f32[1,128], index: 4, kind: input, shape index: {}]
  %s5 = inlined_call_operand.vmem [shape: f32[1,128], index: 5, kind: input, shape index: {}]
  %s6 = inlined_call_operand.<no memory space> [shape: f32[1,1], index: 6, kind: input, shape index: {}]
  %s7 = inlined_call_operand.vmem [shape: f32[16,1], index: 7, kind: output, shape index: {}]
  %s8 = sld [smem:[#allocation0]]
  $region38: #{simple_nn_forward_pallas.1} parent=0
    _
  %s10 = ssub.s32 1, %s8
  %s11 = scalar_select 0, %s10, %s8
  %v12 = vstv %s6
  %13 = vst [vmem:[#allocation2] sm:$0x1] %v12
  // Predicated region
  $region2: #{simple_nn_forward_pallas.1} parent=0 // pred_check
    _
  $region3: #{simple_nn_forward_pallas.1} parent=0 // pred_check_branch
    %15 = sbr.rel (0) target = $region5
  $region4: #{simple_nn_forward_pallas.1} parent=0 // pred_region
    _
  $region5: #{simple_nn_forward_pallas.1} parent=0 // pred_fallthru
    _
  // Predicated region
  $region6: #{simple_nn_forward_pallas.1} parent=0 // pred_check
    _
  $region7: #{simple_nn_forward_pallas.1} parent=0 // pred_check_branch
    %17 = sbr.rel (0) target = $region9
  $region8: #{simple_nn_forward_pallas.1} parent=0 // pred_region
    _
  $region9: #{simple_nn_forward_pallas.1} parent=0 // pred_fallthru
    _
  // Predicated region
  $region10: #{simple_nn_forward_pallas.1} parent=0 // pred_check
    _
  $region11: #{simple_nn_forward_pallas.1} parent=0 // pred_check_branch
    %19 = sbr.rel (0) target = $region13
  $region12: #{simple_nn_forward_pallas.1} parent=0 // pred_region
    _
  $region13: #{simple_nn_forward_pallas.1} parent=0 // pred_fallthru
    _
  // Predicated region
  $region14: #{simple_nn_forward_pallas.1} parent=0 // pred_check
    _
  $region15: #{simple_nn_forward_pallas.1} parent=0 // pred_check_branch
    %21 = sbr.rel (0) target = $region17
  $region16: #{simple_nn_forward_pallas.1} parent=0 // pred_region
    _
  $region17: #{simple_nn_forward_pallas.1} parent=0 // pred_fallthru
    _
  // Predicated region
  $region18: #{simple_nn_forward_pallas.1} parent=0 // pred_check
    _
  $region19: #{simple_nn_forward_pallas.1} parent=0 // pred_check_branch
    %23 = sbr.rel (0) target = $region21
  $region20: #{simple_nn_forward_pallas.1} parent=0 // pred_region
    _
  $region21: #{simple_nn_forward_pallas.1} parent=0 // pred_fallthru
    _
  // Predicated region
  $region22: #{simple_nn_forward_pallas.1} parent=0 // pred_check
    _
  $region23: #{simple_nn_forward_pallas.1} parent=0 // pred_check_branch
    %25 = sbr.rel (0) target = $region25
  $region24: #{simple_nn_forward_pallas.1} parent=0 // pred_region
    _
  $region25: #{simple_nn_forward_pallas.1} parent=0 // pred_fallthru
    _
  // Predicated region
  $region26: #{simple_nn_forward_pallas.1} parent=0 // pred_check
    _
  $region27: #{simple_nn_forward_pallas.1} parent=0 // pred_check_branch
    %27 = sbr.rel (0) target = $region29
  $region28: #{simple_nn_forward_pallas.1} parent=0 // pred_region
    _
  $region29: #{simple_nn_forward_pallas.1} parent=0 // pred_fallthru
    _
  %v29 = vld [vmem:[%s0] sm:$0xf]
  %v30 = vld [vmem:[%s0 + $0x4] sm:$0xf]
  %v31 = vld [vmem:[%s1] sm:$0xf]
  %v32 = vld [vmem:[%s1 + $0x4] sm:$0xf]
  %v33 = vld [vmem:[%s2] sm:$0x1]
  %v35 = vlaneseq
  %v36 = vshrl.u32 %v35, 7
  %v37 = vsub.s32 0, %v36
  %v38 = vrot.slane %v33, %v37
  %v42 = vunpack.c.l.b16 %v29
  %v43 = vunpack.c.l.b16 %v30
  %v44 = vpack.c.b16 %v43, %v42
  %v47 = vunpack.c.l.b16 %v31
  %v48 = vunpack.c.l.b16 %v32
  %v49 = vpack.c.b16 %v48, %v47
  %vm51 = vcmask 130048
  %v53 = vsel %vm51, %v44, 0
  %55 = vmatprep.subr.bf16.mxu0 0
  %56 = vmatpush1.bf16.msra.mxu0 %v49
  %57 = vmatprep.subr.bf16.mxu0 0
  %58 = vmatpush1.bf16.msra.mxu0 0
  %59 = vmatprep.subr.bf16.mxu0 0
  %60 = vmatpush1.bf16.msra.mxu0 0
  %61 = vmatprep.subr.bf16.mxu0 0
  %62 = vmatpush1.bf16.msra.mxu0 0
  %63 = vmatprep.subr.bf16.mxu0 0
  %64 = vmatpush1.bf16.msra.mxu0 0
  %65 = vmatprep.subr.bf16.mxu0 0
  %66 = vmatpush1.bf16.msra.mxu0 0
  %67 = vmatprep.subr.bf16.mxu0 0
  %68 = vmatpush1.bf16.msra.mxu0 0
  %69 = vmatprep.subr.bf16.mxu0 0
  %70 = vmatpush1.bf16.msra.mxu0 0
  %71 = vmatprep.subr.bf16.mxu0 0
  %72 = vmatpush1.bf16.msra.mxu0 0
  %73 = vmatprep.subr.bf16.mxu0 0
  %74 = vmatpush1.bf16.msra.mxu0 0
  %75 = vmatprep.subr.bf16.mxu0 0
  %76 = vmatpush1.bf16.msra.mxu0 0
  %77 = vmatprep.subr.bf16.mxu0 0
  %78 = vmatpush1.bf16.msra.mxu0 0
  %79 = vmatprep.subr.bf16.mxu0 0
  %80 = vmatpush1.bf16.msra.mxu0 0
  %81 = vmatprep.subr.bf16.mxu0 0
  %82 = vmatpush1.bf16.msra.mxu0 0
  %83 = vmatprep.subr.bf16.mxu0 0
  %84 = vmatpush1.bf16.msra.mxu0 0
  %85 = vmatprep.subr.bf16.mxu0 0
  %86 = vmatpush1.bf16.msra.mxu0 0
  %87 = vmatprep.mubr.bf16.mxu0 0
  %88 = vmatmul.mubr.bf16.gmra.mrb[0].mxu0 %v53
  %v89 = vpop.f32.mrb[0].mxu0
  %v90 = vadd.f32 %v38, %v89
  %v91 = vpop.f32.mrb[0].mxu0
  %v92 = vpop.f32.mrb[0].mxu0
  %v93 = vadd.f32 %v38, %v92
  %v94 = vpop.f32.mrb[0].mxu0
  %95 = vdwg.mxu0
  %v96 = vmax.f32 %v90, 0.0
  %v97 = vmax.f32 %v93, 0.0
  %v98 = vpack.c.bf16 %v97, %v96
  %v99 = vld [vmem:[%s3] sm:$0xf]
  %v100 = vld [vmem:[%s3 + $0x4] sm:$0xf]
  %v101 = vld [vmem:[%s3 + $0x8] sm:$0xf]
  %v102 = vld [vmem:[%s3 + $0xc] sm:$0xf]
  %v103 = vld [vmem:[%s3 + $0x10] sm:$0xf]
  %v104 = vld [vmem:[%s3 + $0x14] sm:$0xf]
  %v105 = vld [vmem:[%s3 + $0x18] sm:$0xf]
  %v106 = vld [vmem:[%s3 + $0x1c] sm:$0xf]
  %v107 = vld [vmem:[%s3 + $0x20] sm:$0xf]
  %v108 = vld [vmem:[%s3 + $0x24] sm:$0xf]
  %v109 = vld [vmem:[%s3 + $0x28] sm:$0xf]
  %v110 = vld [vmem:[%s3 + $0x2c] sm:$0xf]
  %v111 = vld [vmem:[%s3 + $0x30] sm:$0xf]
  %v112 = vld [vmem:[%s3 + $0x34] sm:$0xf]
  %v113 = vld [vmem:[%s3 + $0x38] sm:$0xf]
  %v114 = vld [vmem:[%s3 + $0x3c] sm:$0xf]
  %v115 = vld [vmem:[%s4] sm:$0x1]
  %v117 = vlaneseq
  %v118 = vshrl.u32 %v117, 7
  %v119 = vsub.s32 0, %v118
  %v120 = vrot.slane %v115, %v119
  %v138 = vunpack.c.l.b16 %v99
  %v139 = vunpack.c.l.b16 %v100
  %v140 = vunpack.c.l.b16 %v101
  %v141 = vunpack.c.l.b16 %v102
  %v142 = vunpack.c.l.b16 %v103
  %v143 = vunpack.c.l.b16 %v104
  %v144 = vunpack.c.l.b16 %v105
  %v145 = vunpack.c.l.b16 %v106
  %v146 = vunpack.c.l.b16 %v107
  %v147 = vunpack.c.l.b16 %v108
  %v148 = vunpack.c.l.b16 %v109
  %v149 = vunpack.c.l.b16 %v110
  %v150 = vunpack.c.l.b16 %v111
  %v151 = vunpack.c.l.b16 %v112
  %v152 = vunpack.c.l.b16 %v113
  %v153 = vunpack.c.l.b16 %v114
  %v154 = vpack.c.b16 %v139, %v138
  %v155 = vpack.c.b16 %v141, %v140
  %v156 = vpack.c.b16 %v143, %v142
  %v157 = vpack.c.b16 %v145, %v144
  %v158 = vpack.c.b16 %v147, %v146
  %v159 = vpack.c.b16 %v149, %v148
  %v160 = vpack.c.b16 %v151, %v150
  %v161 = vpack.c.b16 %v153, %v152
  %170 = vmatprep.subr.bf16.mxu0 0
  %171 = vmatpush1.bf16.msra.mxu0 %v154
  %172 = vmatprep.subr.bf16.mxu0 0
  %173 = vmatpush1.bf16.msra.mxu0 %v155
  %174 = vmatprep.subr.bf16.mxu0 0
  %175 = vmatpush1.bf16.msra.mxu0 %v156
  %176 = vmatprep.subr.bf16.mxu0 0
  %177 = vmatpush1.bf16.msra.mxu0 %v157
  %178 = vmatprep.subr.bf16.mxu0 0
  %179 = vmatpush1.bf16.msra.mxu0 %v158
  %180 = vmatprep.subr.bf16.mxu0 0
  %181 = vmatpush1.bf16.msra.mxu0 %v159
  %182 = vmatprep.subr.bf16.mxu0 0
  %183 = vmatpush1.bf16.msra.mxu0 %v160
  %184 = vmatprep.subr.bf16.mxu0 0
  %185 = vmatpush1.bf16.msra.mxu0 %v161
  %186 = vmatprep.subr.bf16.mxu0 0
  %187 = vmatpush1.bf16.msra.mxu0 0
  %188 = vmatprep.subr.bf16.mxu0 0
  %189 = vmatpush1.bf16.msra.mxu0 0
  %190 = vmatprep.subr.bf16.mxu0 0
  %191 = vmatpush1.bf16.msra.mxu0 0
  %192 = vmatprep.subr.bf16.mxu0 0
  %193 = vmatpush1.bf16.msra.mxu0 0
  %194 = vmatprep.subr.bf16.mxu0 0
  %195 = vmatpush1.bf16.msra.mxu0 0
  %196 = vmatprep.subr.bf16.mxu0 0
  %197 = vmatpush1.bf16.msra.mxu0 0
  %198 = vmatprep.subr.bf16.mxu0 0
  %199 = vmatpush1.bf16.msra.mxu0 0
  %200 = vmatprep.subr.bf16.mxu0 0
  %201 = vmatpush1.bf16.msra.mxu0 0
  %202 = vmatprep.mubr.bf16.mxu0 0
  %203 = vmatmul.mubr.bf16.gmra.mrb[0].mxu0 %v98
  %v204 = vpop.f32.mrb[0].mxu0
  %v205 = vadd.f32 %v120, %v204
  %v206 = vpop.f32.mrb[0].mxu0
  %v207 = vpop.f32.mrb[0].mxu0
  %v208 = vadd.f32 %v120, %v207
  %v209 = vpop.f32.mrb[0].mxu0
  %210 = vdwg.mxu0
  %v211 = vmax.f32 %v205, 0.0
  %v212 = vmax.f32 %v208, 0.0
  %v213 = vld [vmem:[%s5] sm:$0x1]
  %v215 = vlaneseq
  %v216 = vshrl.u32 %v215, 7
  %v217 = vsub.s32 0, %v216
  %v218 = vrot.slane %v213, %v217
  %v220 = vmul.f32 %v211, %v218
  %v221 = vmul.f32 %v212, %v218
  %222 = vadd.xlane.f32.xlu0 %v220
  %v223 = vpop.xlane.xlu0 %222
  %224 = vadd.xlane.f32.xlu0 %v221
  %v225 = vpop.xlane.xlu0 %224
  %v226 = vld [vmem:[#allocation2] sm:$0x1]
  %v228 = vlaneseq
  %v229 = vshrl.u32 %v228, 7
  %v230 = vsub.s32 0, %v229
  %v231 = vrot.slane %v226, %v230
  %v233 = vadd.f32 %v223, %v231
  %v234 = vadd.f32 %v225, %v231
  %vm235 = vcmask 7168
  %236 = vst.msk [vmem:[%s7] sm:$0xff] %vm235, %v233
  %237 = vst.msk [vmem:[%s7 + $0x8] sm:$0xff] %vm235, %v234
  // Predicated region
  $region30: #{simple_nn_forward_pallas.1} parent=0 // pred_check
    _
  $region31: #{simple_nn_forward_pallas.1} parent=0 // pred_check_branch
    %239 = sbr.rel (0) target = $region33
  $region32: #{simple_nn_forward_pallas.1} parent=0 // pred_region
    _
  $region33: #{simple_nn_forward_pallas.1} parent=0 // pred_fallthru
    _
  // Predicated region
  $region34: #{simple_nn_forward_pallas.1} parent=0 // pred_check
    _
  $region35: #{simple_nn_forward_pallas.1} parent=0 // pred_check_branch
    %241 = sbr.rel (0) target = $region37
  $region36: #{simple_nn_forward_pallas.1} parent=0 // pred_region
    _
  $region37: #{simple_nn_forward_pallas.1} parent=0 // pred_fallthru
    _

</llo_original>
